<compile_context>
chip_gen: v7x
topology: tpu7x:2x2x1
jax: 0.10.0
libtpu: 0.0.40
codegen_flags: <defaults>
</compile_context>

<pallas_src>
import functools
from typing import List

import jax
import jax.numpy as jnp
from jax.experimental import pallas as pl
from jax.experimental.pallas import tpu as pltpu

_LANE = 128
_SUBLANE = 8
_MAX_BATCH_TILE = 1024
_MIB = 1024 * 1024


def _round_up(x: int, m: int) -> int:
    return (x + m - 1) // m * m


def _cdiv(a: int, b: int) -> int:
    return -(-a // b)


def _vmem_capacity_bytes() -> int:
    """Physical VMEM of the attached TPU generation (conservative fallback)."""
    try:
        return int(pltpu.get_tpu_info().vmem_capacity_bytes)
    except Exception:
        return 64 * _MIB  # v7x-sized conservative default


def _vmem_budget_bytes() -> int:
    cap = _vmem_capacity_bytes()
    # Leave headroom for Mosaic internal scratch / semaphores / bookkeeping:
    # ~56 MiB usable on v7x (64 MiB), ~100 MiB on v5e/v6e (128 MiB).
    return max(16 * _MIB, min(cap - 8 * _MIB, 100 * _MIB))


def _fused_vmem_estimate(bt, padded, x_itemsize, param_itemsize, out_itemsize, L):
    """x/out tiles are double-buffered across the batch grid; grid-invariant
    weights/biases are single-buffered (pl.Buffered(1))."""
    x_b = bt * padded[0] * x_itemsize
    o_b = bt * padded[-1] * out_itemsize
    w_b = sum(padded[i] * padded[i + 1] * param_itemsize for i in range(L))
    b_b = sum(padded[i + 1] * 4 for i in range(L))
    return 2 * (x_b + o_b) + (w_b + b_b)


def _fused_mlp_kernel(*refs, num_layers: int, compute_dtype):
    """Fused MLP forward for one batch tile.

    refs layout: (x_ref, w0, b0, ..., w_{L-1}, b_{L-1}, o_ref)
      x_ref : [Bt, D0p]           VMEM
      w_l   : [D_l_p, D_{l+1}_p]  VMEM (zero-padded, compute_dtype)
      b_l   : [1,  D_{l+1}_p]     VMEM (zero-padded, f32)
      o_ref : [Bt, D_L_p]         VMEM
    """
    x_ref = refs[0]
    o_ref = refs[1 + 2 * num_layers]

    h = x_ref[...].astype(compute_dtype)
    for l in range(num_layers):
        w = refs[1 + 2 * l][...]
        b = refs[2 + 2 * l][...]
        # MXU matmul with f32 accumulation; bias-add / ReLU epilogue in f32.
        y = jnp.dot(h, w, preferred_element_type=jnp.float32) + b
        if l + 1 < num_layers:
            # Keep the activation in vregs (no VMEM scratch round-trip).
            h = jnp.maximum(y, 0.0).astype(compute_dtype)
        else:
            o_ref[...] = y.astype(o_ref.dtype)


def _linear_kernel(x_ref, w_ref, b_ref, o_ref, *, apply_relu: bool, compute_dtype):
    """Single Linear (+ReLU) layer for the layer-wise fallback path."""
    y = jnp.dot(x_ref[...].astype(compute_dtype), w_ref[...],
                preferred_element_type=jnp.float32) + b_ref[...]
    if apply_relu:
        y = jnp.maximum(y, 0.0)
    o_ref[...] = y.astype(o_ref.dtype)


class FeatureNet:
    """JAX/Pallas re-implementation of the PyTorch FeatureNet MLP (eval mode)."""

    def __init__(self, num_units: List[int], dropout: float = 0.0, key=None,
                 param_dtype=jnp.bfloat16, out_dtype=jnp.float32,
                 max_batch_tile: int = _MAX_BATCH_TILE, force_layerwise: bool = False):
        assert len(num_units) >= 2
        # Eval path: functional.dropout(x, p, training=False) is the identity for any p.
        # TODO(synk): training-mode dropout (p > 0) via pltpu.prng_* is not implemented.
        self._dropout = dropout
        self._num_units = list(num_units)
        self._num_layers = len(num_units) - 1
        self._param_dtype = jnp.dtype(param_dtype)
        self._out_dtype = jnp.dtype(out_dtype)
        self._max_batch_tile = max(int(max_batch_tile), _SUBLANE)
        self._force_layerwise = force_layerwise
        self._padded_units = tuple(_round_up(u, _LANE) for u in num_units)

        if key is None:
            key = jax.random.PRNGKey(0)

        # Logical (unpadded) f32 params, PyTorch-Linear-style init
        # U(-1/sqrt(fan_in), 1/sqrt(fan_in)); weights stored [in, out] so y = x @ W + b.
        self.weights_f32 = []
        self.biases_f32 = []
        # Device params: zero-padded lane-aligned; biases pre-reshaped to (1, Dout).
        self._weights_dev = []
        self._biases_dev = []
        for i in range(self._num_layers):
            fan_in, fan_out = num_units[i], num_units[i + 1]
            din_p, dout_p = self._padded_units[i], self._padded_units[i + 1]
            key, wk, bk = jax.random.split(key, 3)
            bound = 1.0 / jnp.sqrt(jnp.float32(fan_in))
            w = jax.random.uniform(wk, (fan_in, fan_out), jnp.float32, -bound, bound)
            b = jax.random.uniform(bk, (fan_out,), jnp.float32, -bound, bound)
            self.weights_f32.append(w)
            self.biases_f32.append(b)
            w_pad = jnp.pad(w, ((0, din_p - fan_in), (0, dout_p - fan_out)))
            b_pad = jnp.pad(b, (0, dout_p - fan_out)).reshape(1, dout_p)
            self._weights_dev.append(w_pad.astype(self._param_dtype))
            self._biases_dev.append(b_pad.astype(jnp.float32))

    # ------------------------------------------------------------------ forward
    def __call__(self, x: jax.Array) -> jax.Array:
        orig_shape = x.shape
        if x.ndim != 2:
            x = x.reshape(-1, orig_shape[-1])
        B, din = x.shape
        assert din == self._num_units[0]

        L = self._num_layers
        padded = self._padded_units
        psize = self._param_dtype.itemsize
        osize = self._out_dtype.itemsize
        xsize = x.dtype.itemsize
        budget = _vmem_budget_bytes()

        # Batch tile: sublane-aligned, at least 2 grid steps when possible
        # (feeds both v7x TensorCores via dimension_semantics=("parallel",)),
        # shrink until the fused footprint fits the per-generation VMEM budget.
        bt = min(self._max_batch_tile, _round_up(B, _SUBLANE))
        if B > _SUBLANE:
            bt = min(bt, _round_up(_cdiv(B, 2), _SUBLANE))
        bt = max(bt, _SUBLANE)
        while (bt > _SUBLANE and
               _fused_vmem_estimate(bt, padded, xsize, psize, osize, L) > budget):
            bt = max(_SUBLANE, _round_up(bt // 2, _SUBLANE))

        fits_fused = _fused_vmem_estimate(bt, padded, xsize, psize, osize, L) <= budget
        use_fused = fits_fused and not self._force_layerwise

        b_pad = _round_up(B, bt)
        # Skip the wrapper-side pad copy when the input is already aligned.
        if b_pad != B or padded[0] != din:
            xp = jnp.pad(x, ((0, b_pad - B), (0, padded[0] - din)))
        else:
            xp = x

        if use_fused:
            out = self._forward_fused(xp, bt, b_pad, budget)
        else:
            out = self._forward_layerwise(xp, bt, budget)

        out = out[:B, :self._num_units[-1]]
        if len(orig_shape) != 2:
            out = out.reshape(*orig_shape[:-1], self._num_units[-1])
        return out

    # ------------------------------------------------------------ fused MLP path
    def _forward_fused(self, xp, bt, b_pad, budget):
        L = self._num_layers
        padded = self._padded_units
        pdt = self._param_dtype
        grid = (b_pad // bt,)

        est = _fused_vmem_estimate(bt, padded, xp.dtype.itemsize, pdt.itemsize,
                                   self._out_dtype.itemsize, L)
        vmem_limit = int(min(budget + 4 * _MIB, max(32 * _MIB, est + 4 * _MIB)))

        try:
            flops = 2 * b_pad * sum(padded[i] * padded[i + 1] for i in range(L))
            bytes_acc = (xp.size * xp.dtype.itemsize
                         + sum(w.size * w.dtype.itemsize for w in self._weights_dev)
                         + sum(b.size * b.dtype.itemsize for b in self._biases_dev)
                         + b_pad * padded[-1] * self._out_dtype.itemsize)
            cost = pl.CostEstimate(flops=flops, transcendentals=0,
                                   bytes_accessed=bytes_acc)
        except Exception:
            cost = None

        kernel = functools.partial(_fused_mlp_kernel, num_layers=L, compute_dtype=pdt)

        args = [xp]
        for l in range(L):
            args.append(self._weights_dev[l])
            args.append(self._biases_dev[l])

        def build_in_specs(use_buffered):
            specs = [pl.BlockSpec((bt, padded[0]), lambda i: (i, 0))]
            for l in range(L):
                d_in, d_out = padded[l], padded[l + 1]
                if use_buffered:
                    # Grid-invariant weights/biases: single-buffer them (no overlap
                    # benefit from double-buffering, halves their VMEM footprint).
                    specs.append(pl.BlockSpec((d_in, d_out), lambda i: (0, 0),
                                              pipeline_mode=pl.Buffered(1)))
                    specs.append(pl.BlockSpec((1, d_out), lambda i: (0, 0),
                                              pipeline_mode=pl.Buffered(1)))
                else:
                    specs.append(pl.BlockSpec((d_in, d_out), lambda i: (0, 0)))
                    specs.append(pl.BlockSpec((1, d_out), lambda i: (0, 0)))
            return specs

        def run(use_buffered):
            return pl.pallas_call(
                kernel,
                out_shape=jax.ShapeDtypeStruct((b_pad, padded[-1]), self._out_dtype),
                grid=grid,
                in_specs=build_in_specs(use_buffered),
                out_specs=pl.BlockSpec((bt, padded[-1]), lambda i: (i, 0)),
                compiler_params=pltpu.CompilerParams(
                    dimension_semantics=("parallel",),
                    vmem_limit_bytes=vmem_limit,
                ),
                cost_estimate=cost,
            )(*args)

        try:
            return run(use_buffered=True)
        except Exception:
            # Pallas version without pipeline_mode / Buffered(1) support: double-buffer.
            return run(use_buffered=False)

    # ----------------------------------------------------- layer-wise fallback path
    def _forward_layerwise(self, xp, bt, budget):
        """Fallback when the resident padded weights exceed the VMEM budget:
        one pallas_call per layer, tiling batch x out-features; the BlockSpec
        pipeline streams weight tiles from HBM. Intermediates round-trip through
        HBM in compute dtype."""
        # TODO(synk): hide per-layer weight DMA behind the previous layer's matmul
        # with pltpu.emit_pipeline inside a single fused kernel instead.
        L = self._num_layers
        padded = self._padded_units
        pdt = self._param_dtype
        h = xp
        for l in range(L):
            d_in, d_out = padded[l], padded[l + 1]
            last = (l + 1 == L)
            out_dt = self._out_dtype if last else pdt

            def est(lbt, tn):
                return 2 * (lbt * d_in * 4 + lbt * tn * 4
                            + d_in * tn * pdt.itemsize + tn * 4)

            tn, lbt = d_out, bt
            while tn > _LANE and est(lbt, tn) > budget:
                tn = max(_LANE, _round_up(tn // 2, _LANE))
            while lbt > _SUBLANE and est(lbt, tn) > budget:
                lbt = max(_SUBLANE, _round_up(lbt // 2, _SUBLANE))
            # TODO(synk): K-tiling (d_in) with an accumulator if a single weight
            # column-block still exceeds VMEM.

            lb_pad = _round_up(h.shape[0], lbt)
            if lb_pad != h.shape[0]:
                h = jnp.pad(h, ((0, lb_pad - h.shape[0]), (0, 0)))
            grid = (lb_pad // lbt, d_out // tn)
            vmem_limit = int(min(budget + 4 * _MIB,
                                 max(32 * _MIB, est(lbt, tn) + 4 * _MIB)))
            kernel = functools.partial(_linear_kernel, apply_relu=not last,
                                       compute_dtype=pdt)
            h = pl.pallas_call(
                kernel,
                out_shape=jax.ShapeDtypeStruct((lb_pad, d_out), out_dt),
                grid=grid,
                in_specs=[pl.BlockSpec((lbt, d_in), lambda i, j: (i, 0)),
                          pl.BlockSpec((d_in, tn), lambda i, j: (0, j)),
                          pl.BlockSpec((1, tn), lambda i, j: (0, j))],
                out_specs=pl.BlockSpec((lbt, tn), lambda i, j: (i, j)),
                compiler_params=pltpu.CompilerParams(
                    dimension_semantics=("parallel", "parallel"),
                    vmem_limit_bytes=vmem_limit,
                ),
            )(h, self._weights_dev[l], self._biases_dev[l])
        return h


def _reference_forward(net: FeatureNet, x: jax.Array) -> jax.Array:
    """Pure-JAX reference mirroring the kernel's dtype strategy."""
    dt = net._param_dtype
    h = x.astype(dt)
    for i in range(net._num_layers):
        w = net.weights_f32[i].astype(dt)
        y = jnp.dot(h, w, preferred_element_type=jnp.float32) + net.biases_f32[i]
        if i + 1 < net._num_layers:
            h = jnp.maximum(y, 0.0).astype(dt)
        else:
            h = y
    return h.astype(net._out_dtype)


if __name__ == "__main__":
    key = jax.random.PRNGKey(0)

    # Config 1: f32 params, small "nice" shapes (fused path).
    num_units = [32, 64, 48, 16]
    batch = 8
    key, k1, kx1 = jax.random.split(key, 3)
    net = FeatureNet(num_units, dropout=0.0, key=k1, param_dtype=jnp.float32)
    x = jax.random.normal(kx1, (batch, num_units[0]), jnp.float32)
    out = jax.block_until_ready(net(x))
    ref = _reference_forward(net, x)
    assert out.shape == (batch, num_units[-1])
    assert jnp.allclose(out, ref, atol=1e-4, rtol=1e-4), "f32 mismatch vs reference"

    # Config 2: odd, non-aligned shapes to exercise batch/feature padding.
    num_units2 = [10, 33, 5]
    batch2 = 13
    key, k2, kx2 = jax.random.split(key, 3)
    net2 = FeatureNet(num_units2, dropout=0.0, key=k2, param_dtype=jnp.float32)
    x2 = jax.random.normal(kx2, (batch2, num_units2[0]), jnp.float32)
    out2 = jax.block_until_ready(net2(x2))
    ref2 = _reference_forward(net2, x2)
    assert out2.shape == (batch2, num_units2[-1])
    assert jnp.allclose(out2, ref2, atol=1e-4, rtol=1e-4), "padded f32 mismatch"

    # Config 3: default bf16 params/activations on the MXU, f32 accumulation/epilogue.
    key, k3, kx3 = jax.random.split(key, 3)
    net3 = FeatureNet(num_units, dropout=0.0, key=k3)   # param_dtype defaults to bf16
    x3 = jax.random.normal(kx3, (batch, num_units[0]), jnp.float32)
    out3 = jax.block_until_ready(net3(x3))
    ref3 = _reference_forward(net3, x3)
    assert out3.shape == (batch, num_units[-1])
    assert jnp.allclose(out3, ref3, atol=5e-2, rtol=5e-2), "bf16 mismatch vs reference"

    # Config 4: force the layer-wise fallback path (used when weights don't fit VMEM).
    key, k4, kx4 = jax.random.split(key, 3)
    net4 = FeatureNet(num_units2, dropout=0.0, key=k4, param_dtype=jnp.float32,
                      force_layerwise=True)
    x4 = jax.random.normal(kx4, (batch2, num_units2[0]), jnp.float32)
    out4 = jax.block_until_ready(net4(x4))
    ref4 = _reference_forward(net4, x4)
    assert out4.shape == (batch2, num_units2[-1])
    assert jnp.allclose(out4, ref4, atol=1e-4, rtol=1e-4), "layerwise fallback mismatch"

    print("KERNEL_OK")
</pallas_src>

<mosaic_0001>
module attributes {stable_mosaic.version = 11 : i64} {
  func.func @_fused_mlp_kernel(%arg0: i32, %arg1: memref<8x128xf32, #tpu.memory_space<vmem>>, %arg2: memref<128x128xf32, #tpu.memory_space<vmem>>, %arg3: memref<1x128xf32, #tpu.memory_space<vmem>>, %arg4: memref<128x128xf32, #tpu.memory_space<vmem>>, %arg5: memref<1x128xf32, #tpu.memory_space<vmem>>, %arg6: memref<128x128xf32, #tpu.memory_space<vmem>>, %arg7: memref<1x128xf32, #tpu.memory_space<vmem>>, %arg8: memref<8x128xf32, #tpu.memory_space<vmem>>) attributes {dimension_semantics = [#tpu.dimension_semantics<parallel>], iteration_bounds = array<i64: 1>, scalar_prefetch = 0 : i64, scratch_operands = 0 : i64, tpu.core_type = #tpu.core_type<tc>, window_params = [{transform_indices = @transform_0, window_bounds = array<i64: 8, 128>}, {pipeline_mode = #tpu.pipeline_mode<synchronous>, transform_indices = @transform_1, window_bounds = array<i64: 128, 128>}, {pipeline_mode = #tpu.pipeline_mode<synchronous>, transform_indices = @transform_2, window_bounds = array<i64: 1, 128>}, {pipeline_mode = #tpu.pipeline_mode<synchronous>, transform_indices = @transform_3, window_bounds = array<i64: 128, 128>}, {pipeline_mode = #tpu.pipeline_mode<synchronous>, transform_indices = @transform_4, window_bounds = array<i64: 1, 128>}, {pipeline_mode = #tpu.pipeline_mode<synchronous>, transform_indices = @transform_5, window_bounds = array<i64: 128, 128>}, {pipeline_mode = #tpu.pipeline_mode<synchronous>, transform_indices = @transform_6, window_bounds = array<i64: 1, 128>}, {transform_indices = @transform_7, window_bounds = array<i64: 8, 128>}]} {
    %c0 = arith.constant 0 : index
    %c0_0 = arith.constant 0 : index
    %0 = vector.load %arg1[%c0, %c0_0] : memref<8x128xf32, #tpu.memory_space<vmem>>, vector<8x128xf32>
    %c0_1 = arith.constant 0 : index
    %c0_2 = arith.constant 0 : index
    %1 = vector.load %arg2[%c0_1, %c0_2] : memref<128x128xf32, #tpu.memory_space<vmem>>, vector<128x128xf32>
    %c0_3 = arith.constant 0 : index
    %c0_4 = arith.constant 0 : index
    %2 = vector.load %arg3[%c0_3, %c0_4] : memref<1x128xf32, #tpu.memory_space<vmem>>, vector<1x128xf32>
    %cst = arith.constant dense<0.000000e+00> : vector<8x128xf32>
    %3 = tpu.matmul %0, %1, %cst {dimension_numbers = #tpu.dot_dimension_numbers<[1], [0], [0], [1], [0, 0, 1, 1], [], []>} : vector<8x128xf32>, vector<128x128xf32>, vector<8x128xf32> -> vector<8x128xf32>
    %4 = vector.broadcast %2 : vector<1x128xf32> to vector<8x128xf32>
    %5 = arith.addf %3, %4 : vector<8x128xf32>
    %cst_5 = arith.constant 0.000000e+00 : f32
    %6 = vector.broadcast %cst_5 : f32 to vector<8x128xf32>
    %7 = arith.maximumf %5, %6 : vector<8x128xf32>
    %c0_6 = arith.constant 0 : index
    %c0_7 = arith.constant 0 : index
    %8 = vector.load %arg4[%c0_6, %c0_7] : memref<128x128xf32, #tpu.memory_space<vmem>>, vector<128x128xf32>
    %c0_8 = arith.constant 0 : index
    %c0_9 = arith.constant 0 : index
    %9 = vector.load %arg5[%c0_8, %c0_9] : memref<1x128xf32, #tpu.memory_space<vmem>>, vector<1x128xf32>
    %cst_10 = arith.constant dense<0.000000e+00> : vector<8x128xf32>
    %10 = tpu.matmul %7, %8, %cst_10 {dimension_numbers = #tpu.dot_dimension_numbers<[1], [0], [0], [1], [0, 0, 1, 1], [], []>} : vector<8x128xf32>, vector<128x128xf32>, vector<8x128xf32> -> vector<8x128xf32>
    %11 = vector.broadcast %9 : vector<1x128xf32> to vector<8x128xf32>
    %12 = arith.addf %10, %11 : vector<8x128xf32>
    %cst_11 = arith.constant 0.000000e+00 : f32
    %13 = vector.broadcast %cst_11 : f32 to vector<8x128xf32>
    %14 = arith.maximumf %12, %13 : vector<8x128xf32>
    %c0_12 = arith.constant 0 : index
    %c0_13 = arith.constant 0 : index
    %15 = vector.load %arg6[%c0_12, %c0_13] : memref<128x128xf32, #tpu.memory_space<vmem>>, vector<128x128xf32>
    %c0_14 = arith.constant 0 : index
    %c0_15 = arith.constant 0 : index
    %16 = vector.load %arg7[%c0_14, %c0_15] : memref<1x128xf32, #tpu.memory_space<vmem>>, vector<1x128xf32>
    %cst_16 = arith.constant dense<0.000000e+00> : vector<8x128xf32>
    %17 = tpu.matmul %14, %15, %cst_16 {dimension_numbers = #tpu.dot_dimension_numbers<[1], [0], [0], [1], [0, 0, 1, 1], [], []>} : vector<8x128xf32>, vector<128x128xf32>, vector<8x128xf32> -> vector<8x128xf32>
    %18 = vector.broadcast %16 : vector<1x128xf32> to vector<8x128xf32>
    %19 = arith.addf %17, %18 : vector<8x128xf32>
    %c0_17 = arith.constant 0 : index
    %c0_18 = arith.constant 0 : index
    %20 = vector.load %arg8[%c0_17, %c0_18] : memref<8x128xf32, #tpu.memory_space<vmem>>, vector<8x128xf32>
    tpu.vector_store %arg8[%c0_17, %c0_18], %19 {strides = array<i32>} : memref<8x128xf32, #tpu.memory_space<vmem>>, vector<8x128xf32>,
    return
  }
  func.func @transform_0(%arg0: i32) -> (i32, i32) {
    %c0_i32 = arith.constant 0 : i32
    %c0_i32_0 = arith.constant 0 : i32
    return %arg0, %c0_i32 : i32, i32
  }
  func.func @transform_1(%arg0: i32) -> (i32, i32) {
    %c0_i32 = arith.constant 0 : i32
    %c0_i32_0 = arith.constant 0 : i32
    %c0_i32_1 = arith.constant 0 : i32
    return %c0_i32, %c0_i32_0 : i32, i32
  }
  func.func @transform_2(%arg0: i32) -> (i32, i32) {
    %c0_i32 = arith.constant 0 : i32
    %c0_i32_0 = arith.constant 0 : i32
    %c0_i32_1 = arith.constant 0 : i32
    return %c0_i32, %c0_i32_0 : i32, i32
  }
  func.func @transform_3(%arg0: i32) -> (i32, i32) {
    %c0_i32 = arith.constant 0 : i32
    %c0_i32_0 = arith.constant 0 : i32
    %c0_i32_1 = arith.constant 0 : i32
    return %c0_i32, %c0_i32_0 : i32, i32
  }
  func.func @transform_4(%arg0: i32) -> (i32, i32) {
    %c0_i32 = arith.constant 0 : i32
    %c0_i32_0 = arith.constant 0 : i32
    %c0_i32_1 = arith.constant 0 : i32
    return %c0_i32, %c0_i32_0 : i32, i32
  }
  func.func @transform_5(%arg0: i32) -> (i32, i32) {
    %c0_i32 = arith.constant 0 : i32
    %c0_i32_0 = arith.constant 0 : i32
    %c0_i32_1 = arith.constant 0 : i32
    return %c0_i32, %c0_i32_0 : i32, i32
  }
  func.func @transform_6(%arg0: i32) -> (i32, i32) {
    %c0_i32 = arith.constant 0 : i32
    %c0_i32_0 = arith.constant 0 : i32
    %c0_i32_1 = arith.constant 0 : i32
    return %c0_i32, %c0_i32_0 : i32, i32
  }
  func.func @transform_7(%arg0: i32) -> (i32, i32) {
    %c0_i32 = arith.constant 0 : i32
    %c0_i32_0 = arith.constant 0 : i32
    return %arg0, %c0_i32 : i32, i32
  }
}

module attributes {stable_mosaic.version = 11 : i64} {
  func.func @_fused_mlp_kernel(%arg0: i32, %arg1: memref<8x128xf32, #tpu.memory_space<vmem>>, %arg2: memref<128x128xf32, #tpu.memory_space<vmem>>, %arg3: memref<1x128xf32, #tpu.memory_space<vmem>>, %arg4: memref<128x128xf32, #tpu.memory_space<vmem>>, %arg5: memref<1x128xf32, #tpu.memory_space<vmem>>, %arg6: memref<128x128xf32, #tpu.memory_space<vmem>>, %arg7: memref<1x128xf32, #tpu.memory_space<vmem>>, %arg8: memref<8x128xf32, #tpu.memory_space<vmem>>) attributes {dimension_semantics = [#tpu.dimension_semantics<parallel>], iteration_bounds = array<i64: 1>, scalar_prefetch = 0 : i64, scratch_operands = 0 : i64, tpu.core_type = #tpu.core_type<tc>, window_params = [{transform_indices = @transform_0, window_bounds = array<i64: 8, 128>}, {pipeline_mode = #tpu.pipeline_mode<synchronous>, transform_indices = @transform_1, window_bounds = array<i64: 128, 128>}, {pipeline_mode = #tpu.pipeline_mode<synchronous>, transform_indices = @transform_2, window_bounds = array<i64: 1, 128>}, {pipeline_mode = #tpu.pipeline_mode<synchronous>, transform_indices = @transform_3, window_bounds = array<i64: 128, 128>}, {pipeline_mode = #tpu.pipeline_mode<synchronous>, transform_indices = @transform_4, window_bounds = array<i64: 1, 128>}, {pipeline_mode = #tpu.pipeline_mode<synchronous>, transform_indices = @transform_5, window_bounds = array<i64: 128, 128>}, {pipeline_mode = #tpu.pipeline_mode<synchronous>, transform_indices = @transform_6, window_bounds = array<i64: 1, 128>}, {transform_indices = @transform_7, window_bounds = array<i64: 8, 128>}]} {
    %c0 = arith.constant 0 : index
    %c0_0 = arith.constant 0 : index
    %0 = vector.load %arg1[%c0, %c0_0] : memref<8x128xf32, #tpu.memory_space<vmem>>, vector<8x128xf32>
    %c0_1 = arith.constant 0 : index
    %c0_2 = arith.constant 0 : index
    %1 = vector.load %arg2[%c0_1, %c0_2] : memref<128x128xf32, #tpu.memory_space<vmem>>, vector<128x128xf32>
    %c0_3 = arith.constant 0 : index
    %c0_4 = arith.constant 0 : index
    %2 = vector.load %arg3[%c0_3, %c0_4] : memref<1x128xf32, #tpu.memory_space<vmem>>, vector<1x128xf32>
    %cst = arith.constant dense<0.000000e+00> : vector<8x128xf32>
    %3 = tpu.matmul %0, %1, %cst {dimension_numbers = #tpu.dot_dimension_numbers<[1], [0], [0], [1], [0, 0, 1, 1], [], []>} : vector<8x128xf32>, vector<128x128xf32>, vector<8x128xf32> -> vector<8x128xf32>
    %4 = vector.broadcast %2 : vector<1x128xf32> to vector<8x128xf32>
    %5 = arith.addf %3, %4 : vector<8x128xf32>
    %cst_5 = arith.constant 0.000000e+00 : f32
    %6 = vector.broadcast %cst_5 : f32 to vector<8x128xf32>
    %7 = arith.maximumf %5, %6 : vector<8x128xf32>
    %c0_6 = arith.constant 0 : index
    %c0_7 = arith.constant 0 : index
    %8 = vector.load %arg4[%c0_6, %c0_7] : memref<128x128xf32, #tpu.memory_space<vmem>>, vector<128x128xf32>
    %c0_8 = arith.constant 0 : index
    %c0_9 = arith.constant 0 : index
    %9 = vector.load %arg5[%c0_8, %c0_9] : memref<1x128xf32, #tpu.memory_space<vmem>>, vector<1x128xf32>
    %cst_10 = arith.constant dense<0.000000e+00> : vector<8x128xf32>
    %10 = tpu.matmul %7, %8, %cst_10 {dimension_numbers = #tpu.dot_dimension_numbers<[1], [0], [0], [1], [0, 0, 1, 1], [], []>} : vector<8x128xf32>, vector<128x128xf32>, vector<8x128xf32> -> vector<8x128xf32>
    %11 = vector.broadcast %9 : vector<1x128xf32> to vector<8x128xf32>
    %12 = arith.addf %10, %11 : vector<8x128xf32>
    %cst_11 = arith.constant 0.000000e+00 : f32
    %13 = vector.broadcast %cst_11 : f32 to vector<8x128xf32>
    %14 = arith.maximumf %12, %13 : vector<8x128xf32>
    %c0_12 = arith.constant 0 : index
    %c0_13 = arith.constant 0 : index
    %15 = vector.load %arg6[%c0_12, %c0_13] : memref<128x128xf32, #tpu.memory_space<vmem>>, vector<128x128xf32>
    %c0_14 = arith.constant 0 : index
    %c0_15 = arith.constant 0 : index
    %16 = vector.load %arg7[%c0_14, %c0_15] : memref<1x128xf32, #tpu.memory_space<vmem>>, vector<1x128xf32>
    %cst_16 = arith.constant dense<0.000000e+00> : vector<8x128xf32>
    %17 = tpu.matmul %14, %15, %cst_16 {dimension_numbers = #tpu.dot_dimension_numbers<[1], [0], [0], [1], [0, 0, 1, 1], [], []>} : vector<8x128xf32>, vector<128x128xf32>, vector<8x128xf32> -> vector<8x128xf32>
    %18 = vector.broadcast %16 : vector<1x128xf32> to vector<8x128xf32>
    %19 = arith.addf %17, %18 : vector<8x128xf32>
    %c0_17 = arith.constant 0 : index
    %c0_18 = arith.constant 0 : index
    %20 = vector.load %arg8[%c0_17, %c0_18] : memref<8x128xf32, #tpu.memory_space<vmem>>, vector<8x128xf32>
    tpu.vector_store %arg8[%c0_17, %c0_18], %19 {strides = array<i32>} : memref<8x128xf32, #tpu.memory_space<vmem>>, vector<8x128xf32>,
    return
  }
  func.func @transform_0(%arg0: i32) -> (i32, i32) {
    %c0_i32 = arith.constant 0 : i32
    %c0_i32_0 = arith.constant 0 : i32
    return %arg0, %c0_i32 : i32, i32
  }
  func.func @transform_1(%arg0: i32) -> (i32, i32) {
    %c0_i32 = arith.constant 0 : i32
    %c0_i32_0 = arith.constant 0 : i32
    %c0_i32_1 = arith.constant 0 : i32
    return %c0_i32, %c0_i32_0 : i32, i32
  }
  func.func @transform_2(%arg0: i32) -> (i32, i32) {
    %c0_i32 = arith.constant 0 : i32
    %c0_i32_0 = arith.constant 0 : i32
    %c0_i32_1 = arith.constant 0 : i32
    return %c0_i32, %c0_i32_0 : i32, i32
  }
  func.func @transform_3(%arg0: i32) -> (i32, i32) {
    %c0_i32 = arith.constant 0 : i32
    %c0_i32_0 = arith.constant 0 : i32
    %c0_i32_1 = arith.constant 0 : i32
    return %c0_i32, %c0_i32_0 : i32, i32
  }
  func.func @transform_4(%arg0: i32) -> (i32, i32) {
    %c0_i32 = arith.constant 0 : i32
    %c0_i32_0 = arith.constant 0 : i32
    %c0_i32_1 = arith.constant 0 : i32
    return %c0_i32, %c0_i32_0 : i32, i32
  }
  func.func @transform_5(%arg0: i32) -> (i32, i32) {
    %c0_i32 = arith.constant 0 : i32
    %c0_i32_0 = arith.constant 0 : i32
    %c0_i32_1 = arith.constant 0 : i32
    return %c0_i32, %c0_i32_0 : i32, i32
  }
  func.func @transform_6(%arg0: i32) -> (i32, i32) {
    %c0_i32 = arith.constant 0 : i32
    %c0_i32_0 = arith.constant 0 : i32
    %c0_i32_1 = arith.constant 0 : i32
    return %c0_i32, %c0_i32_0 : i32, i32
  }
  func.func @transform_7(%arg0: i32) -> (i32, i32) {
    %c0_i32 = arith.constant 0 : i32
    %c0_i32_0 = arith.constant 0 : i32
    return %arg0, %c0_i32 : i32, i32
  }
}

</mosaic_0001>

<llo_original>
// kernel: tpu_custom_call.1
$region0: #{tpu_custom_call.1}
  #allocation0 [shape = 'u32[]', space=smem, size = 0x4, offset = 0x4, fixed_abs, tag = 'smem constant byte address 0x4 - core index']
  #allocation1 [shape = 'u32[144,128]{1,0:T(1,128)}', space=vmem, size = 0x12000, scoped, tag = 'internal scratch']
  %s0 = inlined_call_operand.hbm [shape: f32[8,128], index: 0, kind: input, shape index: {}]
  %s1 = inlined_call_operand.hbm [shape: f32[128,128], index: 1, kind: input, shape index: {}]
  %s2 = inlined_call_operand.vmem [shape: f32[1,128], index: 2, kind: input, shape index: {}]
  %s3 = inlined_call_operand.hbm [shape: f32[128,128], index: 3, kind: input, shape index: {}]
  %s4 = inlined_call_operand.vmem [shape: f32[1,128], index: 4, kind: input, shape index: {}]
  %s5 = inlined_call_operand.hbm [shape: f32[128,128], index: 5, kind: input, shape index: {}]
  %s6 = inlined_call_operand.vmem [shape: f32[1,128], index: 6, kind: input, shape index: {}]
  %s7 = inlined_call_operand.hbm [shape: f32[8,128], index: 7, kind: output, shape index: {}]
  %s8 = sld [smem:[#allocation0]]
  $region54: #{tpu_custom_call.1} parent=0
    _
  %s10 = ssub.s32 1, %s8
  %s11 = scalar_select 0, %s10, %s8
  $region1: #{tpu_custom_call.1} parent=0
    #allocation2 [shape = 'u8[4096]{0}', space=vmem, size = 0x1000, scoped, tag = 'input window, operand 0, single buffered']
    #allocation3 [shape = 's32[1]{0}', space=sflag, size = 0x4, scoped, tag = 'scoped memory for tpu_custom_call.1']
    #allocation4 [shape = 's32[1]{0}', space=sflag, size = 0x4, scoped, tag = 'scoped memory for tpu_custom_call.1']
    #allocation5 [shape = 'u8[65536]{0}', space=vmem, size = 0x10000, scoped, tag = 'input window, operand 1, single buffered']
    #allocation6 [shape = 's32[1]{0}', space=sflag, size = 0x4, scoped, tag = 'scoped memory for tpu_custom_call.1']
    #allocation7 [shape = 'u8[65536]{0}', space=vmem, size = 0x10000, scoped, tag = 'input window, operand 3, single buffered']
    #allocation8 [shape = 'u8[65536]{0}', space=vmem, size = 0x10000, scoped, tag = 'input window, operand 5, single buffered']
    #allocation9 [shape = 's32[1]{0}', space=sflag, size = 0x4, scoped, tag = 'scoped memory for tpu_custom_call.1']
    #allocation10 [shape = 'u8[4096]{0}', space=vmem, size = 0x1000, scoped, tag = 'output window, operand 0, single buffered']
    %12 = vsyncpa [#allocation3], 0
    %13 = vsyncpa [#allocation6], 0
    %14 = vsyncpa [#allocation9], 0
    %15 = vsyncpa [#allocation4], 0
    // Predicated region
    $region2: #{tpu_custom_call.1} parent=1 // pred_check
      _
    $region3: #{tpu_custom_call.1} parent=1 // pred_check_branch
      %17 = sbr.rel (0) target = $region5
    $region4: #{tpu_custom_call.1} parent=1 // pred_region
      %s19 = ssub.s32 128, 128
      %20 = vsyncadd [#allocation3], %s19
      %s22 = sshll.u32 [#allocation2], 4
      %s23 = int_to_ptr.vmem [resolvable:$true] %s22
      %25 = dma.hbm_to_vmem [thread:$0]  %s0, 128, %s23, [#allocation3]
    $region5: #{tpu_custom_call.1} parent=1 // pred_fallthru
      _
    // Predicated region
    $region6: #{tpu_custom_call.1} parent=1 // pred_check
      _
    $region7: #{tpu_custom_call.1} parent=1 // pred_check_branch
      %27 = sbr.rel (0) target = $region9
    $region8: #{tpu_custom_call.1} parent=1 // pred_region
      %s29 = ssub.s32 2048, 2048
      %30 = vsyncadd [#allocation6], %s29
      %s31 = sshll.u32 [#allocation5], 4
      %s32 = int_to_ptr.vmem [resolvable:$true] %s31
      %37 = dma.hbm_to_vmem [thread:$0]  %s1, 2048, %s32, [#allocation6], 128, 128, 8
    $region9: #{tpu_custom_call.1} parent=1 // pred_fallthru
      _
    // Predicated region
    $region10: #{tpu_custom_call.1} parent=1 // pred_check
      _
    $region11: #{tpu_custom_call.1} parent=1 // pred_check_branch
      %39 = sbr.rel (0) target = $region13
    $region12: #{tpu_custom_call.1} parent=1 // pred_region
      _
    $region13: #{tpu_custom_call.1} parent=1 // pred_fallthru
      _
    // Predicated region
    $region14: #{tpu_custom_call.1} parent=1 // pred_check
      _
    $region15: #{tpu_custom_call.1} parent=1 // pred_check_branch
      %41 = sbr.rel (0) target = $region17
    $region16: #{tpu_custom_call.1} parent=1 // pred_region
      %s43 = ssub.s32 2048, 2048
      %44 = vsyncadd [#allocation6], %s43
      %s45 = sshll.u32 [#allocation7], 4
      %s46 = int_to_ptr.vmem [resolvable:$true] %s45
      %51 = dma.hbm_to_vmem [thread:$0]  %s3, 2048, %s46, [#allocation6], 128, 128, 8
    $region17: #{tpu_custom_call.1} parent=1 // pred_fallthru
      _
    // Predicated region
    $region18: #{tpu_custom_call.1} parent=1 // pred_check
      _
    $region19: #{tpu_custom_call.1} parent=1 // pred_check_branch
      %53 = sbr.rel (0) target = $region21
    $region20: #{tpu_custom_call.1} parent=1 // pred_region
      _
    $region21: #{tpu_custom_call.1} parent=1 // pred_fallthru
      _
    // Predicated region
    $region22: #{tpu_custom_call.1} parent=1 // pred_check
      _
    $region23: #{tpu_custom_call.1} parent=1 // pred_check_branch
      %55 = sbr.rel (0) target = $region25
    $region24: #{tpu_custom_call.1} parent=1 // pred_region
      %s57 = ssub.s32 2048, 2048
      %58 = vsyncadd [#allocation9], %s57
      %s59 = sshll.u32 [#allocation8], 4
      %s60 = int_to_ptr.vmem [resolvable:$true] %s59
      %65 = dma.hbm_to_vmem [thread:$0]  %s5, 2048, %s60, [#allocation9], 128, 128, 8
    $region25: #{tpu_custom_call.1} parent=1 // pred_fallthru
      _
    // Predicated region
    $region26: #{tpu_custom_call.1} parent=1 // pred_check
      _
    $region27: #{tpu_custom_call.1} parent=1 // pred_check_branch
      %67 = sbr.rel (0) target = $region29
    $region28: #{tpu_custom_call.1} parent=1 // pred_region
      _
    $region29: #{tpu_custom_call.1} parent=1 // pred_fallthru
      _
    // Predicated region
    $region30: #{tpu_custom_call.1} parent=1 // pred_check
      _
    $region31: #{tpu_custom_call.1} parent=1 // pred_check_branch
      %69 = sbr.rel (0) target = $region33
    $region32: #{tpu_custom_call.1} parent=1 // pred_region
      %70 = dma.done [#allocation3], 128
    $region33: #{tpu_custom_call.1} parent=1 // pred_fallthru
      _
    // Predicated region
    $region34: #{tpu_custom_call.1} parent=1 // pred_check
      _
    $region35: #{tpu_custom_call.1} parent=1 // pred_check_branch
      %72 = sbr.rel (0) target = $region37
    $region36: #{tpu_custom_call.1} parent=1 // pred_region
      %73 = dma.done [#allocation6], 2048
    $region37: #{tpu_custom_call.1} parent=1 // pred_fallthru
      _
    // Predicated region
    $region38: #{tpu_custom_call.1} parent=1 // pred_check
      _
    $region39: #{tpu_custom_call.1} parent=1 // pred_check_branch
      %75 = sbr.rel (0) target = $region41
    $region40: #{tpu_custom_call.1} parent=1 // pred_region
      %76 = dma.done [#allocation6], 2048
    $region41: #{tpu_custom_call.1} parent=1 // pred_fallthru
      _
    // Predicated region
    $region42: #{tpu_custom_call.1} parent=1 // pred_check
      _
    $region43: #{tpu_custom_call.1} parent=1 // pred_check_branch
      %78 = sbr.rel (0) target = $region45
    $region44: #{tpu_custom_call.1} parent=1 // pred_region
      %79 = dma.done [#allocation9], 2048
    $region45: #{tpu_custom_call.1} parent=1 // pred_fallthru
      _
    %v80 = vld [vmem:[#allocation2] sm:$0xff]
    %v81 = vld [vmem:[#allocation5] sm:$0xff]
    %v82 = vld [vmem:[#allocation5 + $0x8] sm:$0xff]
    %v83 = vld [vmem:[#allocation5 + $0x10] sm:$0xff]
    %v84 = vld [vmem:[#allocation5 + $0x18] sm:$0xff]
    %v85 = vld [vmem:[#allocation5 + $0x20] sm:$0xff]
    %v86 = vld [vmem:[#allocation5 + $0x28] sm:$0xff]
    %v87 = vld [vmem:[#allocation5 + $0x30] sm:$0xff]
    %v88 = vld [vmem:[#allocation5 + $0x38] sm:$0xff]
    %v89 = vld [vmem:[#allocation5 + $0x40] sm:$0xff]
    %v90 = vld [vmem:[#allocation5 + $0x48] sm:$0xff]
    %v91 = vld [vmem:[#allocation5 + $0x50] sm:$0xff]
    %v92 = vld [vmem:[#allocation5 + $0x58] sm:$0xff]
    %v93 = vld [vmem:[#allocation5 + $0x60] sm:$0xff]
    %v94 = vld [vmem:[#allocation5 + $0x68] sm:$0xff]
    %v95 = vld [vmem:[#allocation5 + $0x70] sm:$0xff]
    %v96 = vld [vmem:[#allocation5 + $0x78] sm:$0xff]
    %v97 = vld [vmem:[%s2] sm:$0x1]
    %v99 = vlaneseq
    %v100 = vshrl.u32 %v99, 7
    %v101 = vsub.s32 0, %v100
    %v102 = vrot.slane %v97, %v101
    %104 = vmatprep.subr.mxu0 0.0
    %105 = vmatpush1.msra.mxu0 %v81
    %106 = vmatprep.subr.mxu0 0.0
    %107 = vmatpush1.msra.mxu0 %v82
    %108 = vmatprep.subr.mxu0 0.0
    %109 = vmatpush1.msra.mxu0 %v83
    %110 = vmatprep.subr.mxu0 0.0
    %111 = vmatpush1.msra.mxu0 %v84
    %112 = vmatprep.subr.mxu0 0.0
    %113 = vmatpush1.msra.mxu0 %v85
    %114 = vmatprep.subr.mxu0 0.0
    %115 = vmatpush1.msra.mxu0 %v86
    %116 = vmatprep.subr.mxu0 0.0
    %117 = vmatpush1.msra.mxu0 %v87
    %118 = vmatprep.subr.mxu0 0.0
    %119 = vmatpush1.msra.mxu0 %v88
    %120 = vmatprep.subr.mxu0 0.0
    %121 = vmatpush1.msra.mxu0 %v89
    %122 = vmatprep.subr.mxu0 0.0
    %123 = vmatpush1.msra.mxu0 %v90
    %124 = vmatprep.subr.mxu0 0.0
    %125 = vmatpush1.msra.mxu0 %v91
    %126 = vmatprep.subr.mxu0 0.0
    %127 = vmatpush1.msra.mxu0 %v92
    %128 = vmatprep.subr.mxu0 0.0
    %129 = vmatpush1.msra.mxu0 %v93
    %130 = vmatprep.subr.mxu0 0.0
    %131 = vmatpush1.msra.mxu0 %v94
    %132 = vmatprep.subr.mxu0 0.0
    %133 = vmatpush1.msra.mxu0 %v95
    %134 = vmatprep.subr.mxu0 0.0
    %135 = vmatpush1.msra.mxu0 %v96
    %136 = vmatprep.subr.mxu0 0.0
    %137 = vmatpush1.msra.mxu0 0.0
    %138 = vmatprep.subr.mxu0 0.0
    %139 = vmatpush1.msra.mxu0 0.0
    %140 = vmatprep.subr.mxu0 0.0
    %141 = vmatpush1.msra.mxu0 0.0
    %142 = vmatprep.subr.mxu0 0.0
    %143 = vmatpush1.msra.mxu0 0.0
    %144 = vmatprep.subr.mxu0 0.0
    %145 = vmatpush1.msra.mxu0 0.0
    %146 = vmatprep.subr.mxu0 0.0
    %147 = vmatpush1.msra.mxu0 0.0
    %148 = vmatprep.subr.mxu0 0.0
    %149 = vmatpush1.msra.mxu0 0.0
    %150 = vmatprep.subr.mxu0 0.0
    %151 = vmatpush1.msra.mxu0 0.0
    %152 = vmatprep.subr.mxu0 0.0
    %153 = vmatpush1.msra.mxu0 0.0
    %154 = vmatprep.subr.mxu0 0.0
    %155 = vmatpush1.msra.mxu0 0.0
    %156 = vmatprep.subr.mxu0 0.0
    %157 = vmatpush1.msra.mxu0 0.0
    %158 = vmatprep.subr.mxu0 0.0
    %159 = vmatpush1.msra.mxu0 0.0
    %160 = vmatprep.subr.mxu0 0.0
    %161 = vmatpush1.msra.mxu0 0.0
    %162 = vmatprep.subr.mxu0 0.0
    %163 = vmatpush1.msra.mxu0 0.0
    %164 = vmatprep.subr.mxu0 0.0
    %165 = vmatpush1.msra.mxu0 0.0
    %166 = vmatprep.subr.mxu0 0.0
    %167 = vmatpush1.msra.mxu0 0.0
    %168 = vmatprep.mubr.f32.mxu0 0.0
    %169 = vmatmul.mubr.f32.gmra.mrb[0].mxu0 %v80
    %v170 = vpop.f32.mrb[0].mxu0
    %v171 = vadd.f32 %v102, %v170
    %v172 = vpop.f32.mrb[0].mxu0
    %173 = vdwg.mxu0
    %v174 = vmax.f32 %v171, 0.0
    %v175 = vld [vmem:[#allocation7] sm:$0xff]
    %v176 = vld [vmem:[#allocation7 + $0x8] sm:$0xff]
    %v177 = vld [vmem:[#allocation7 + $0x10] sm:$0xff]
    %v178 = vld [vmem:[#allocation7 + $0x18] sm:$0xff]
    %v179 = vld [vmem:[#allocation7 + $0x20] sm:$0xff]
    %v180 = vld [vmem:[#allocation7 + $0x28] sm:$0xff]
    %v181 = vld [vmem:[#allocation7 + $0x30] sm:$0xff]
    %v182 = vld [vmem:[#allocation7 + $0x38] sm:$0xff]
    %v183 = vld [vmem:[#allocation7 + $0x40] sm:$0xff]
    %v184 = vld [vmem:[#allocation7 + $0x48] sm:$0xff]
    %v185 = vld [vmem:[#allocation7 + $0x50] sm:$0xff]
    %v186 = vld [vmem:[#allocation7 + $0x58] sm:$0xff]
    %v187 = vld [vmem:[#allocation7 + $0x60] sm:$0xff]
    %v188 = vld [vmem:[#allocation7 + $0x68] sm:$0xff]
    %v189 = vld [vmem:[#allocation7 + $0x70] sm:$0xff]
    %v190 = vld [vmem:[#allocation7 + $0x78] sm:$0xff]
    %v191 = vld [vmem:[%s4] sm:$0x1]
    %v193 = vlaneseq
    %v194 = vshrl.u32 %v193, 7
    %v195 = vsub.s32 0, %v194
    %v196 = vrot.slane %v191, %v195
    %198 = vmatprep.subr.mxu0 0.0
    %199 = vmatpush1.msra.mxu0 %v175
    %200 = vmatprep.subr.mxu0 0.0
    %201 = vmatpush1.msra.mxu0 %v176
    %202 = vmatprep.subr.mxu0 0.0
    %203 = vmatpush1.msra.mxu0 %v177
    %204 = vmatprep.subr.mxu0 0.0
    %205 = vmatpush1.msra.mxu0 %v178
    %206 = vmatprep.subr.mxu0 0.0
    %207 = vmatpush1.msra.mxu0 %v179
    %208 = vmatprep.subr.mxu0 0.0
    %209 = vmatpush1.msra.mxu0 %v180
    %210 = vmatprep.subr.mxu0 0.0
    %211 = vmatpush1.msra.mxu0 %v181
    %212 = vmatprep.subr.mxu0 0.0
    %213 = vmatpush1.msra.mxu0 %v182
    %214 = vmatprep.subr.mxu0 0.0
    %215 = vmatpush1.msra.mxu0 %v183
    %216 = vmatprep.subr.mxu0 0.0
    %217 = vmatpush1.msra.mxu0 %v184
    %218 = vmatprep.subr.mxu0 0.0
    %219 = vmatpush1.msra.mxu0 %v185
    %220 = vmatprep.subr.mxu0 0.0
    %221 = vmatpush1.msra.mxu0 %v186
    %222 = vmatprep.subr.mxu0 0.0
    %223 = vmatpush1.msra.mxu0 %v187
    %224 = vmatprep.subr.mxu0 0.0
    %225 = vmatpush1.msra.mxu0 %v188
    %226 = vmatprep.subr.mxu0 0.0
    %227 = vmatpush1.msra.mxu0 %v189
    %228 = vmatprep.subr.mxu0 0.0
    %229 = vmatpush1.msra.mxu0 %v190
    %230 = vmatprep.subr.mxu0 0.0
    %231 = vmatpush1.msra.mxu0 0.0
    %232 = vmatprep.subr.mxu0 0.0
    %233 = vmatpush1.msra.mxu0 0.0
    %234 = vmatprep.subr.mxu0 0.0
    %235 = vmatpush1.msra.mxu0 0.0
    %236 = vmatprep.subr.mxu0 0.0
    %237 = vmatpush1.msra.mxu0 0.0
    %238 = vmatprep.subr.mxu0 0.0
    %239 = vmatpush1.msra.mxu0 0.0
    %240 = vmatprep.subr.mxu0 0.0
    %241 = vmatpush1.msra.mxu0 0.0
    %242 = vmatprep.subr.mxu0 0.0
    %243 = vmatpush1.msra.mxu0 0.0
    %244 = vmatprep.subr.mxu0 0.0
    %245 = vmatpush1.msra.mxu0 0.0
    %246 = vmatprep.subr.mxu0 0.0
    %247 = vmatpush1.msra.mxu0 0.0
    %248 = vmatprep.subr.mxu0 0.0
    %249 = vmatpush1.msra.mxu0 0.0
    %250 = vmatprep.subr.mxu0 0.0
    %251 = vmatpush1.msra.mxu0 0.0
    %252 = vmatprep.subr.mxu0 0.0
    %253 = vmatpush1.msra.mxu0 0.0
    %254 = vmatprep.subr.mxu0 0.0
    %255 = vmatpush1.msra.mxu0 0.0
    %256 = vmatprep.subr.mxu0 0.0
    %257 = vmatpush1.msra.mxu0 0.0
    %258 = vmatprep.subr.mxu0 0.0
    %259 = vmatpush1.msra.mxu0 0.0
    %260 = vmatprep.subr.mxu0 0.0
    %261 = vmatpush1.msra.mxu0 0.0
    %262 = vmatprep.mubr.f32.mxu0 0.0
    %263 = vmatmul.mubr.f32.gmra.mrb[0].mxu0 %v174
    %v264 = vpop.f32.mrb[0].mxu0
    %v265 = vadd.f32 %v196, %v264
    %v266 = vpop.f32.mrb[0].mxu0
    %267 = vdwg.mxu0
    %v268 = vmax.f32 %v265, 0.0
    %v269 = vld [vmem:[#allocation8] sm:$0xff]
    %v270 = vld [vmem:[#allocation8 + $0x8] sm:$0xff]
    %v271 = vld [vmem:[#allocation8 + $0x10] sm:$0xff]
    %v272 = vld [vmem:[#allocation8 + $0x18] sm:$0xff]
    %v273 = vld [vmem:[#allocation8 + $0x20] sm:$0xff]
    %v274 = vld [vmem:[#allocation8 + $0x28] sm:$0xff]
    %v275 = vld [vmem:[#allocation8 + $0x30] sm:$0xff]
    %v276 = vld [vmem:[#allocation8 + $0x38] sm:$0xff]
    %v277 = vld [vmem:[#allocation8 + $0x40] sm:$0xff]
    %v278 = vld [vmem:[#allocation8 + $0x48] sm:$0xff]
    %v279 = vld [vmem:[#allocation8 + $0x50] sm:$0xff]
    %v280 = vld [vmem:[#allocation8 + $0x58] sm:$0xff]
    %v281 = vld [vmem:[#allocation8 + $0x60] sm:$0xff]
    %v282 = vld [vmem:[#allocation8 + $0x68] sm:$0xff]
    %v283 = vld [vmem:[#allocation8 + $0x70] sm:$0xff]
    %v284 = vld [vmem:[#allocation8 + $0x78] sm:$0xff]
    %v285 = vld [vmem:[%s6] sm:$0x1]
    %v287 = vlaneseq
    %v288 = vshrl.u32 %v287, 7
    %v289 = vsub.s32 0, %v288
    %v290 = vrot.slane %v285, %v289
    %292 = vmatprep.subr.mxu0 0.0
    %293 = vmatpush1.msra.mxu0 %v269
    %294 = vmatprep.subr.mxu0 0.0
    %295 = vmatpush1.msra.mxu0 %v270
    %296 = vmatprep.subr.mxu0 0.0
    %297 = vmatpush1.msra.mxu0 %v271
    %298 = vmatprep.subr.mxu0 0.0
    %299 = vmatpush1.msra.mxu0 %v272
    %300 = vmatprep.subr.mxu0 0.0
    %301 = vmatpush1.msra.mxu0 %v273
    %302 = vmatprep.subr.mxu0 0.0
    %303 = vmatpush1.msra.mxu0 %v274
    %304 = vmatprep.subr.mxu0 0.0
    %305 = vmatpush1.msra.mxu0 %v275
    %306 = vmatprep.subr.mxu0 0.0
    %307 = vmatpush1.msra.mxu0 %v276
    %308 = vmatprep.subr.mxu0 0.0
    %309 = vmatpush1.msra.mxu0 %v277
    %310 = vmatprep.subr.mxu0 0.0
    %311 = vmatpush1.msra.mxu0 %v278
    %312 = vmatprep.subr.mxu0 0.0
    %313 = vmatpush1.msra.mxu0 %v279
    %314 = vmatprep.subr.mxu0 0.0
    %315 = vmatpush1.msra.mxu0 %v280
    %316 = vmatprep.subr.mxu0 0.0
    %317 = vmatpush1.msra.mxu0 %v281
    %318 = vmatprep.subr.mxu0 0.0
    %319 = vmatpush1.msra.mxu0 %v282
    %320 = vmatprep.subr.mxu0 0.0
    %321 = vmatpush1.msra.mxu0 %v283
    %322 = vmatprep.subr.mxu0 0.0
    %323 = vmatpush1.msra.mxu0 %v284
    %324 = vmatprep.subr.mxu0 0.0
    %325 = vmatpush1.msra.mxu0 0.0
    %326 = vmatprep.subr.mxu0 0.0
    %327 = vmatpush1.msra.mxu0 0.0
    %328 = vmatprep.subr.mxu0 0.0
    %329 = vmatpush1.msra.mxu0 0.0
    %330 = vmatprep.subr.mxu0 0.0
    %331 = vmatpush1.msra.mxu0 0.0
    %332 = vmatprep.subr.mxu0 0.0
    %333 = vmatpush1.msra.mxu0 0.0
    %334 = vmatprep.subr.mxu0 0.0
    %335 = vmatpush1.msra.mxu0 0.0
    %336 = vmatprep.subr.mxu0 0.0
    %337 = vmatpush1.msra.mxu0 0.0
    %338 = vmatprep.subr.mxu0 0.0
    %339 = vmatpush1.msra.mxu0 0.0
    %340 = vmatprep.subr.mxu0 0.0
    %341 = vmatpush1.msra.mxu0 0.0
    %342 = vmatprep.subr.mxu0 0.0
    %343 = vmatpush1.msra.mxu0 0.0
    %344 = vmatprep.subr.mxu0 0.0
    %345 = vmatpush1.msra.mxu0 0.0
    %346 = vmatprep.subr.mxu0 0.0
    %347 = vmatpush1.msra.mxu0 0.0
    %348 = vmatprep.subr.mxu0 0.0
    %349 = vmatpush1.msra.mxu0 0.0
    %350 = vmatprep.subr.mxu0 0.0
    %351 = vmatpush1.msra.mxu0 0.0
    %352 = vmatprep.subr.mxu0 0.0
    %353 = vmatpush1.msra.mxu0 0.0
    %354 = vmatprep.subr.mxu0 0.0
    %355 = vmatpush1.msra.mxu0 0.0
    %356 = vmatprep.mubr.f32.mxu0 0.0
    %357 = vmatmul.mubr.f32.gmra.mrb[0].mxu0 %v268
    %v358 = vpop.f32.mrb[0].mxu0
    %v359 = vadd.f32 %v290, %v358
    %v360 = vpop.f32.mrb[0].mxu0
    %361 = vdwg.mxu0
    %362 = vst [vmem:[#allocation10] sm:$0xff] %v359
    // Predicated region
    $region46: #{tpu_custom_call.1} parent=1 // pred_check
      _
    $region47: #{tpu_custom_call.1} parent=1 // pred_check_branch
      %364 = sbr.rel (0) target = $region49
    $region48: #{tpu_custom_call.1} parent=1 // pred_region
      %s366 = ssub.s32 128, 128
      %367 = vsyncadd [#allocation4], %s366
      %s369 = sshll.u32 [#allocation10], 4
      %s370 = int_to_ptr.vmem [resolvable:$true] %s369
      %372 = dma.vmem_to_hbm [thread:$0]  %s370, 128, %s7, [#allocation4]
    $region49: #{tpu_custom_call.1} parent=1 // pred_fallthru
      _
    // Predicated region
    $region50: #{tpu_custom_call.1} parent=1 // pred_check
      _
    $region51: #{tpu_custom_call.1} parent=1 // pred_check_branch
      %374 = sbr.rel (0) target = $region53
    $region52: #{tpu_custom_call.1} parent=1 // pred_region
      %375 = dma.done [#allocation4], 128
    $region53: #{tpu_custom_call.1} parent=1 // pred_fallthru
      _
    %376 = vsyncpa [#allocation3], 1
    %377 = vsyncpa [#allocation6], 1
    %378 = vsyncpa [#allocation9], 1
    %379 = vsyncpa [#allocation4], 1

// kernel: tpu_custom_call.1
$region0: #{tpu_custom_call.1}
  #allocation0 [shape = 'u32[]', space=smem, size = 0x4, offset = 0x4, fixed_abs, tag = 'smem constant byte address 0x4 - core index']
  #allocation1 [shape = 'u32[144,128]{1,0:T(1,128)}', space=vmem, size = 0x12000, scoped, tag = 'internal scratch']
  %s0 = inlined_call_operand.hbm [shape: f32[8,128], index: 0, kind: input, shape index: {}]
  %s1 = inlined_call_operand.hbm [shape: f32[128,128], index: 1, kind: input, shape index: {}]
  %s2 = inlined_call_operand.vmem [shape: f32[1,128], index: 2, kind: input, shape index: {}]
  %s3 = inlined_call_operand.hbm [shape: f32[128,128], index: 3, kind: input, shape index: {}]
  %s4 = inlined_call_operand.vmem [shape: f32[1,128], index: 4, kind: input, shape index: {}]
  %s5 = inlined_call_operand.hbm [shape: f32[128,128], index: 5, kind: input, shape index: {}]
  %s6 = inlined_call_operand.vmem [shape: f32[1,128], index: 6, kind: input, shape index: {}]
  %s7 = inlined_call_operand.hbm [shape: f32[8,128], index: 7, kind: output, shape index: {}]
  %s8 = sld [smem:[#allocation0]]
  $region54: #{tpu_custom_call.1} parent=0
    _
  %s10 = ssub.s32 1, %s8
  %s11 = scalar_select 0, %s10, %s8
  $region1: #{tpu_custom_call.1} parent=0
    #allocation2 [shape = 'u8[4096]{0}', space=vmem, size = 0x1000, scoped, tag = 'input window, operand 0, single buffered']
    #allocation3 [shape = 's32[1]{0}', space=sflag, size = 0x4, scoped, tag = 'scoped memory for tpu_custom_call.1']
    #allocation4 [shape = 's32[1]{0}', space=sflag, size = 0x4, scoped, tag = 'scoped memory for tpu_custom_call.1']
    #allocation5 [shape = 'u8[65536]{0}', space=vmem, size = 0x10000, scoped, tag = 'input window, operand 1, single buffered']
    #allocation6 [shape = 's32[1]{0}', space=sflag, size = 0x4, scoped, tag = 'scoped memory for tpu_custom_call.1']
    #allocation7 [shape = 'u8[65536]{0}', space=vmem, size = 0x10000, scoped, tag = 'input window, operand 3, single buffered']
    #allocation8 [shape = 'u8[65536]{0}', space=vmem, size = 0x10000, scoped, tag = 'input window, operand 5, single buffered']
    #allocation9 [shape = 's32[1]{0}', space=sflag, size = 0x4, scoped, tag = 'scoped memory for tpu_custom_call.1']
    #allocation10 [shape = 'u8[4096]{0}', space=vmem, size = 0x1000, scoped, tag = 'output window, operand 0, single buffered']
    %12 = vsyncpa [#allocation3], 0
    %13 = vsyncpa [#allocation6], 0
    %14 = vsyncpa [#allocation9], 0
    %15 = vsyncpa [#allocation4], 0
    // Predicated region
    $region2: #{tpu_custom_call.1} parent=1 // pred_check
      _
    $region3: #{tpu_custom_call.1} parent=1 // pred_check_branch
      %17 = sbr.rel (0) target = $region5
    $region4: #{tpu_custom_call.1} parent=1 // pred_region
      %s19 = ssub.s32 128, 128
      %20 = vsyncadd [#allocation3], %s19
      %s22 = sshll.u32 [#allocation2], 4
      %s23 = int_to_ptr.vmem [resolvable:$true] %s22
      %25 = dma.hbm_to_vmem [thread:$0]  %s0, 128, %s23, [#allocation3]
    $region5: #{tpu_custom_call.1} parent=1 // pred_fallthru
      _
    // Predicated region
    $region6: #{tpu_custom_call.1} parent=1 // pred_check
      _
    $region7: #{tpu_custom_call.1} parent=1 // pred_check_branch
      %27 = sbr.rel (0) target = $region9
    $region8: #{tpu_custom_call.1} parent=1 // pred_region
      %s29 = ssub.s32 2048, 2048
      %30 = vsyncadd [#allocation6], %s29
      %s31 = sshll.u32 [#allocation5], 4
      %s32 = int_to_ptr.vmem [resolvable:$true] %s31
      %37 = dma.hbm_to_vmem [thread:$0]  %s1, 2048, %s32, [#allocation6], 128, 128, 8
    $region9: #{tpu_custom_call.1} parent=1 // pred_fallthru
      _
    // Predicated region
    $region10: #{tpu_custom_call.1} parent=1 // pred_check
      _
    $region11: #{tpu_custom_call.1} parent=1 // pred_check_branch
      %39 = sbr.rel (0) target = $region13
    $region12: #{tpu_custom_call.1} parent=1 // pred_region
      _
    $region13: #{tpu_custom_call.1} parent=1 // pred_fallthru
      _
    // Predicated region
    $region14: #{tpu_custom_call.1} parent=1 // pred_check
      _
    $region15: #{tpu_custom_call.1} parent=1 // pred_check_branch
      %41 = sbr.rel (0) target = $region17
    $region16: #{tpu_custom_call.1} parent=1 // pred_region
      %s43 = ssub.s32 2048, 2048
      %44 = vsyncadd [#allocation6], %s43
      %s45 = sshll.u32 [#allocation7], 4
      %s46 = int_to_ptr.vmem [resolvable:$true] %s45
      %51 = dma.hbm_to_vmem [thread:$0]  %s3, 2048, %s46, [#allocation6], 128, 128, 8
    $region17: #{tpu_custom_call.1} parent=1 // pred_fallthru
      _
    // Predicated region
    $region18: #{tpu_custom_call.1} parent=1 // pred_check
      _
    $region19: #{tpu_custom_call.1} parent=1 // pred_check_branch
      %53 = sbr.rel (0) target = $region21
    $region20: #{tpu_custom_call.1} parent=1 // pred_region
      _
    $region21: #{tpu_custom_call.1} parent=1 // pred_fallthru
      _
    // Predicated region
    $region22: #{tpu_custom_call.1} parent=1 // pred_check
      _
    $region23: #{tpu_custom_call.1} parent=1 // pred_check_branch
      %55 = sbr.rel (0) target = $region25
    $region24: #{tpu_custom_call.1} parent=1 // pred_region
      %s57 = ssub.s32 2048, 2048
      %58 = vsyncadd [#allocation9], %s57
      %s59 = sshll.u32 [#allocation8], 4
      %s60 = int_to_ptr.vmem [resolvable:$true] %s59
      %65 = dma.hbm_to_vmem [thread:$0]  %s5, 2048, %s60, [#allocation9], 128, 128, 8
    $region25: #{tpu_custom_call.1} parent=1 // pred_fallthru
      _
    // Predicated region
    $region26: #{tpu_custom_call.1} parent=1 // pred_check
      _
    $region27: #{tpu_custom_call.1} parent=1 // pred_check_branch
      %67 = sbr.rel (0) target = $region29
    $region28: #{tpu_custom_call.1} parent=1 // pred_region
      _
    $region29: #{tpu_custom_call.1} parent=1 // pred_fallthru
      _
    // Predicated region
    $region30: #{tpu_custom_call.1} parent=1 // pred_check
      _
    $region31: #{tpu_custom_call.1} parent=1 // pred_check_branch
      %69 = sbr.rel (0) target = $region33
    $region32: #{tpu_custom_call.1} parent=1 // pred_region
      %70 = dma.done [#allocation3], 128
    $region33: #{tpu_custom_call.1} parent=1 // pred_fallthru
      _
    // Predicated region
    $region34: #{tpu_custom_call.1} parent=1 // pred_check
      _
    $region35: #{tpu_custom_call.1} parent=1 // pred_check_branch
      %72 = sbr.rel (0) target = $region37
    $region36: #{tpu_custom_call.1} parent=1 // pred_region
      %73 = dma.done [#allocation6], 2048
    $region37: #{tpu_custom_call.1} parent=1 // pred_fallthru
      _
    // Predicated region
    $region38: #{tpu_custom_call.1} parent=1 // pred_check
      _
    $region39: #{tpu_custom_call.1} parent=1 // pred_check_branch
      %75 = sbr.rel (0) target = $region41
    $region40: #{tpu_custom_call.1} parent=1 // pred_region
      %76 = dma.done [#allocation6], 2048
    $region41: #{tpu_custom_call.1} parent=1 // pred_fallthru
      _
    // Predicated region
    $region42: #{tpu_custom_call.1} parent=1 // pred_check
      _
    $region43: #{tpu_custom_call.1} parent=1 // pred_check_branch
      %78 = sbr.rel (0) target = $region45
    $region44: #{tpu_custom_call.1} parent=1 // pred_region
      %79 = dma.done [#allocation9], 2048
    $region45: #{tpu_custom_call.1} parent=1 // pred_fallthru
      _
    %v80 = vld [vmem:[#allocation2] sm:$0xff]
    %v81 = vld [vmem:[#allocation5] sm:$0xff]
    %v82 = vld [vmem:[#allocation5 + $0x8] sm:$0xff]
    %v83 = vld [vmem:[#allocation5 + $0x10] sm:$0xff]
    %v84 = vld [vmem:[#allocation5 + $0x18] sm:$0xff]
    %v85 = vld [vmem:[#allocation5 + $0x20] sm:$0xff]
    %v86 = vld [vmem:[#allocation5 + $0x28] sm:$0xff]
    %v87 = vld [vmem:[#allocation5 + $0x30] sm:$0xff]
    %v88 = vld [vmem:[#allocation5 + $0x38] sm:$0xff]
    %v89 = vld [vmem:[#allocation5 + $0x40] sm:$0xff]
    %v90 = vld [vmem:[#allocation5 + $0x48] sm:$0xff]
    %v91 = vld [vmem:[#allocation5 + $0x50] sm:$0xff]
    %v92 = vld [vmem:[#allocation5 + $0x58] sm:$0xff]
    %v93 = vld [vmem:[#allocation5 + $0x60] sm:$0xff]
    %v94 = vld [vmem:[#allocation5 + $0x68] sm:$0xff]
    %v95 = vld [vmem:[#allocation5 + $0x70] sm:$0xff]
    %v96 = vld [vmem:[#allocation5 + $0x78] sm:$0xff]
    %v97 = vld [vmem:[%s2] sm:$0x1]
    %v99 = vlaneseq
    %v100 = vshrl.u32 %v99, 7
    %v101 = vsub.s32 0, %v100
    %v102 = vrot.slane %v97, %v101
    %104 = vmatprep.subr.mxu0 0.0
    %105 = vmatpush1.msra.mxu0 %v81
    %106 = vmatprep.subr.mxu0 0.0
    %107 = vmatpush1.msra.mxu0 %v82
    %108 = vmatprep.subr.mxu0 0.0
    %109 = vmatpush1.msra.mxu0 %v83
    %110 = vmatprep.subr.mxu0 0.0
    %111 = vmatpush1.msra.mxu0 %v84
    %112 = vmatprep.subr.mxu0 0.0
    %113 = vmatpush1.msra.mxu0 %v85
    %114 = vmatprep.subr.mxu0 0.0
    %115 = vmatpush1.msra.mxu0 %v86
    %116 = vmatprep.subr.mxu0 0.0
    %117 = vmatpush1.msra.mxu0 %v87
    %118 = vmatprep.subr.mxu0 0.0
    %119 = vmatpush1.msra.mxu0 %v88
    %120 = vmatprep.subr.mxu0 0.0
    %121 = vmatpush1.msra.mxu0 %v89
    %122 = vmatprep.subr.mxu0 0.0
    %123 = vmatpush1.msra.mxu0 %v90
    %124 = vmatprep.subr.mxu0 0.0
    %125 = vmatpush1.msra.mxu0 %v91
    %126 = vmatprep.subr.mxu0 0.0
    %127 = vmatpush1.msra.mxu0 %v92
    %128 = vmatprep.subr.mxu0 0.0
    %129 = vmatpush1.msra.mxu0 %v93
    %130 = vmatprep.subr.mxu0 0.0
    %131 = vmatpush1.msra.mxu0 %v94
    %132 = vmatprep.subr.mxu0 0.0
    %133 = vmatpush1.msra.mxu0 %v95
    %134 = vmatprep.subr.mxu0 0.0
    %135 = vmatpush1.msra.mxu0 %v96
    %136 = vmatprep.subr.mxu0 0.0
    %137 = vmatpush1.msra.mxu0 0.0
    %138 = vmatprep.subr.mxu0 0.0
    %139 = vmatpush1.msra.mxu0 0.0
    %140 = vmatprep.subr.mxu0 0.0
    %141 = vmatpush1.msra.mxu0 0.0
    %142 = vmatprep.subr.mxu0 0.0
    %143 = vmatpush1.msra.mxu0 0.0
    %144 = vmatprep.subr.mxu0 0.0
    %145 = vmatpush1.msra.mxu0 0.0
    %146 = vmatprep.subr.mxu0 0.0
    %147 = vmatpush1.msra.mxu0 0.0
    %148 = vmatprep.subr.mxu0 0.0
    %149 = vmatpush1.msra.mxu0 0.0
    %150 = vmatprep.subr.mxu0 0.0
    %151 = vmatpush1.msra.mxu0 0.0
    %152 = vmatprep.subr.mxu0 0.0
    %153 = vmatpush1.msra.mxu0 0.0
    %154 = vmatprep.subr.mxu0 0.0
    %155 = vmatpush1.msra.mxu0 0.0
    %156 = vmatprep.subr.mxu0 0.0
    %157 = vmatpush1.msra.mxu0 0.0
    %158 = vmatprep.subr.mxu0 0.0
    %159 = vmatpush1.msra.mxu0 0.0
    %160 = vmatprep.subr.mxu0 0.0
    %161 = vmatpush1.msra.mxu0 0.0
    %162 = vmatprep.subr.mxu0 0.0
    %163 = vmatpush1.msra.mxu0 0.0
    %164 = vmatprep.subr.mxu0 0.0
    %165 = vmatpush1.msra.mxu0 0.0
    %166 = vmatprep.subr.mxu0 0.0
    %167 = vmatpush1.msra.mxu0 0.0
    %168 = vmatprep.mubr.f32.mxu0 0.0
    %169 = vmatmul.mubr.f32.gmra.mrb[0].mxu0 %v80
    %v170 = vpop.f32.mrb[0].mxu0
    %v171 = vadd.f32 %v102, %v170
    %v172 = vpop.f32.mrb[0].mxu0
    %173 = vdwg.mxu0
    %v174 = vmax.f32 %v171, 0.0
    %v175 = vld [vmem:[#allocation7] sm:$0xff]
    %v176 = vld [vmem:[#allocation7 + $0x8] sm:$0xff]
    %v177 = vld [vmem:[#allocation7 + $0x10] sm:$0xff]
    %v178 = vld [vmem:[#allocation7 + $0x18] sm:$0xff]
    %v179 = vld [vmem:[#allocation7 + $0x20] sm:$0xff]
    %v180 = vld [vmem:[#allocation7 + $0x28] sm:$0xff]
    %v181 = vld [vmem:[#allocation7 + $0x30] sm:$0xff]
    %v182 = vld [vmem:[#allocation7 + $0x38] sm:$0xff]
    %v183 = vld [vmem:[#allocation7 + $0x40] sm:$0xff]
    %v184 = vld [vmem:[#allocation7 + $0x48] sm:$0xff]
    %v185 = vld [vmem:[#allocation7 + $0x50] sm:$0xff]
    %v186 = vld [vmem:[#allocation7 + $0x58] sm:$0xff]
    %v187 = vld [vmem:[#allocation7 + $0x60] sm:$0xff]
    %v188 = vld [vmem:[#allocation7 + $0x68] sm:$0xff]
    %v189 = vld [vmem:[#allocation7 + $0x70] sm:$0xff]
    %v190 = vld [vmem:[#allocation7 + $0x78] sm:$0xff]
    %v191 = vld [vmem:[%s4] sm:$0x1]
    %v193 = vlaneseq
    %v194 = vshrl.u32 %v193, 7
    %v195 = vsub.s32 0, %v194
    %v196 = vrot.slane %v191, %v195
    %198 = vmatprep.subr.mxu0 0.0
    %199 = vmatpush1.msra.mxu0 %v175
    %200 = vmatprep.subr.mxu0 0.0
    %201 = vmatpush1.msra.mxu0 %v176
    %202 = vmatprep.subr.mxu0 0.0
    %203 = vmatpush1.msra.mxu0 %v177
    %204 = vmatprep.subr.mxu0 0.0
    %205 = vmatpush1.msra.mxu0 %v178
    %206 = vmatprep.subr.mxu0 0.0
    %207 = vmatpush1.msra.mxu0 %v179
    %208 = vmatprep.subr.mxu0 0.0
    %209 = vmatpush1.msra.mxu0 %v180
    %210 = vmatprep.subr.mxu0 0.0
    %211 = vmatpush1.msra.mxu0 %v181
    %212 = vmatprep.subr.mxu0 0.0
    %213 = vmatpush1.msra.mxu0 %v182
    %214 = vmatprep.subr.mxu0 0.0
    %215 = vmatpush1.msra.mxu0 %v183
    %216 = vmatprep.subr.mxu0 0.0
    %217 = vmatpush1.msra.mxu0 %v184
    %218 = vmatprep.subr.mxu0 0.0
    %219 = vmatpush1.msra.mxu0 %v185
    %220 = vmatprep.subr.mxu0 0.0
    %221 = vmatpush1.msra.mxu0 %v186
    %222 = vmatprep.subr.mxu0 0.0
    %223 = vmatpush1.msra.mxu0 %v187
    %224 = vmatprep.subr.mxu0 0.0
    %225 = vmatpush1.msra.mxu0 %v188
    %226 = vmatprep.subr.mxu0 0.0
    %227 = vmatpush1.msra.mxu0 %v189
    %228 = vmatprep.subr.mxu0 0.0
    %229 = vmatpush1.msra.mxu0 %v190
    %230 = vmatprep.subr.mxu0 0.0
    %231 = vmatpush1.msra.mxu0 0.0
    %232 = vmatprep.subr.mxu0 0.0
    %233 = vmatpush1.msra.mxu0 0.0
    %234 = vmatprep.subr.mxu0 0.0
    %235 = vmatpush1.msra.mxu0 0.0
    %236 = vmatprep.subr.mxu0 0.0
    %237 = vmatpush1.msra.mxu0 0.0
    %238 = vmatprep.subr.mxu0 0.0
    %239 = vmatpush1.msra.mxu0 0.0
    %240 = vmatprep.subr.mxu0 0.0
    %241 = vmatpush1.msra.mxu0 0.0
    %242 = vmatprep.subr.mxu0 0.0
    %243 = vmatpush1.msra.mxu0 0.0
    %244 = vmatprep.subr.mxu0 0.0
    %245 = vmatpush1.msra.mxu0 0.0
    %246 = vmatprep.subr.mxu0 0.0
    %247 = vmatpush1.msra.mxu0 0.0
    %248 = vmatprep.subr.mxu0 0.0
    %249 = vmatpush1.msra.mxu0 0.0
    %250 = vmatprep.subr.mxu0 0.0
    %251 = vmatpush1.msra.mxu0 0.0
    %252 = vmatprep.subr.mxu0 0.0
    %253 = vmatpush1.msra.mxu0 0.0
    %254 = vmatprep.subr.mxu0 0.0
    %255 = vmatpush1.msra.mxu0 0.0
    %256 = vmatprep.subr.mxu0 0.0
    %257 = vmatpush1.msra.mxu0 0.0
    %258 = vmatprep.subr.mxu0 0.0
    %259 = vmatpush1.msra.mxu0 0.0
    %260 = vmatprep.subr.mxu0 0.0
    %261 = vmatpush1.msra.mxu0 0.0
    %262 = vmatprep.mubr.f32.mxu0 0.0
    %263 = vmatmul.mubr.f32.gmra.mrb[0].mxu0 %v174
    %v264 = vpop.f32.mrb[0].mxu0
    %v265 = vadd.f32 %v196, %v264
    %v266 = vpop.f32.mrb[0].mxu0
    %267 = vdwg.mxu0
    %v268 = vmax.f32 %v265, 0.0
    %v269 = vld [vmem:[#allocation8] sm:$0xff]
    %v270 = vld [vmem:[#allocation8 + $0x8] sm:$0xff]
    %v271 = vld [vmem:[#allocation8 + $0x10] sm:$0xff]
    %v272 = vld [vmem:[#allocation8 + $0x18] sm:$0xff]
    %v273 = vld [vmem:[#allocation8 + $0x20] sm:$0xff]
    %v274 = vld [vmem:[#allocation8 + $0x28] sm:$0xff]
    %v275 = vld [vmem:[#allocation8 + $0x30] sm:$0xff]
    %v276 = vld [vmem:[#allocation8 + $0x38] sm:$0xff]
    %v277 = vld [vmem:[#allocation8 + $0x40] sm:$0xff]
    %v278 = vld [vmem:[#allocation8 + $0x48] sm:$0xff]
    %v279 = vld [vmem:[#allocation8 + $0x50] sm:$0xff]
    %v280 = vld [vmem:[#allocation8 + $0x58] sm:$0xff]
    %v281 = vld [vmem:[#allocation8 + $0x60] sm:$0xff]
    %v282 = vld [vmem:[#allocation8 + $0x68] sm:$0xff]
    %v283 = vld [vmem:[#allocation8 + $0x70] sm:$0xff]
    %v284 = vld [vmem:[#allocation8 + $0x78] sm:$0xff]
    %v285 = vld [vmem:[%s6] sm:$0x1]
    %v287 = vlaneseq
    %v288 = vshrl.u32 %v287, 7
    %v289 = vsub.s32 0, %v288
    %v290 = vrot.slane %v285, %v289
    %292 = vmatprep.subr.mxu0 0.0
    %293 = vmatpush1.msra.mxu0 %v269
    %294 = vmatprep.subr.mxu0 0.0
    %295 = vmatpush1.msra.mxu0 %v270
    %296 = vmatprep.subr.mxu0 0.0
    %297 = vmatpush1.msra.mxu0 %v271
    %298 = vmatprep.subr.mxu0 0.0
    %299 = vmatpush1.msra.mxu0 %v272
    %300 = vmatprep.subr.mxu0 0.0
    %301 = vmatpush1.msra.mxu0 %v273
    %302 = vmatprep.subr.mxu0 0.0
    %303 = vmatpush1.msra.mxu0 %v274
    %304 = vmatprep.subr.mxu0 0.0
    %305 = vmatpush1.msra.mxu0 %v275
    %306 = vmatprep.subr.mxu0 0.0
    %307 = vmatpush1.msra.mxu0 %v276
    %308 = vmatprep.subr.mxu0 0.0
    %309 = vmatpush1.msra.mxu0 %v277
    %310 = vmatprep.subr.mxu0 0.0
    %311 = vmatpush1.msra.mxu0 %v278
    %312 = vmatprep.subr.mxu0 0.0
    %313 = vmatpush1.msra.mxu0 %v279
    %314 = vmatprep.subr.mxu0 0.0
    %315 = vmatpush1.msra.mxu0 %v280
    %316 = vmatprep.subr.mxu0 0.0
    %317 = vmatpush1.msra.mxu0 %v281
    %318 = vmatprep.subr.mxu0 0.0
    %319 = vmatpush1.msra.mxu0 %v282
    %320 = vmatprep.subr.mxu0 0.0
    %321 = vmatpush1.msra.mxu0 %v283
    %322 = vmatprep.subr.mxu0 0.0
    %323 = vmatpush1.msra.mxu0 %v284
    %324 = vmatprep.subr.mxu0 0.0
    %325 = vmatpush1.msra.mxu0 0.0
    %326 = vmatprep.subr.mxu0 0.0
    %327 = vmatpush1.msra.mxu0 0.0
    %328 = vmatprep.subr.mxu0 0.0
    %329 = vmatpush1.msra.mxu0 0.0
    %330 = vmatprep.subr.mxu0 0.0
    %331 = vmatpush1.msra.mxu0 0.0
    %332 = vmatprep.subr.mxu0 0.0
    %333 = vmatpush1.msra.mxu0 0.0
    %334 = vmatprep.subr.mxu0 0.0
    %335 = vmatpush1.msra.mxu0 0.0
    %336 = vmatprep.subr.mxu0 0.0
    %337 = vmatpush1.msra.mxu0 0.0
    %338 = vmatprep.subr.mxu0 0.0
    %339 = vmatpush1.msra.mxu0 0.0
    %340 = vmatprep.subr.mxu0 0.0
    %341 = vmatpush1.msra.mxu0 0.0
    %342 = vmatprep.subr.mxu0 0.0
    %343 = vmatpush1.msra.mxu0 0.0
    %344 = vmatprep.subr.mxu0 0.0
    %345 = vmatpush1.msra.mxu0 0.0
    %346 = vmatprep.subr.mxu0 0.0
    %347 = vmatpush1.msra.mxu0 0.0
    %348 = vmatprep.subr.mxu0 0.0
    %349 = vmatpush1.msra.mxu0 0.0
    %350 = vmatprep.subr.mxu0 0.0
    %351 = vmatpush1.msra.mxu0 0.0
    %352 = vmatprep.subr.mxu0 0.0
    %353 = vmatpush1.msra.mxu0 0.0
    %354 = vmatprep.subr.mxu0 0.0
    %355 = vmatpush1.msra.mxu0 0.0
    %356 = vmatprep.mubr.f32.mxu0 0.0
    %357 = vmatmul.mubr.f32.gmra.mrb[0].mxu0 %v268
    %v358 = vpop.f32.mrb[0].mxu0
    %v359 = vadd.f32 %v290, %v358
    %v360 = vpop.f32.mrb[0].mxu0
    %361 = vdwg.mxu0
    %362 = vst [vmem:[#allocation10] sm:$0xff] %v359
    // Predicated region
    $region46: #{tpu_custom_call.1} parent=1 // pred_check
      _
    $region47: #{tpu_custom_call.1} parent=1 // pred_check_branch
      %364 = sbr.rel (0) target = $region49
    $region48: #{tpu_custom_call.1} parent=1 // pred_region
      %s366 = ssub.s32 128, 128
      %367 = vsyncadd [#allocation4], %s366
      %s369 = sshll.u32 [#allocation10], 4
      %s370 = int_to_ptr.vmem [resolvable:$true] %s369
      %372 = dma.vmem_to_hbm [thread:$0]  %s370, 128, %s7, [#allocation4]
    $region49: #{tpu_custom_call.1} parent=1 // pred_fallthru
      _
    // Predicated region
    $region50: #{tpu_custom_call.1} parent=1 // pred_check
      _
    $region51: #{tpu_custom_call.1} parent=1 // pred_check_branch
      %374 = sbr.rel (0) target = $region53
    $region52: #{tpu_custom_call.1} parent=1 // pred_region
      %375 = dma.done [#allocation4], 128
    $region53: #{tpu_custom_call.1} parent=1 // pred_fallthru
      _
    %376 = vsyncpa [#allocation3], 1
    %377 = vsyncpa [#allocation6], 1
    %378 = vsyncpa [#allocation9], 1
    %379 = vsyncpa [#allocation4], 1

</llo_original>
